<compile_context>
chip_gen: v7x
topology: tpu7x:2x2x1
jax: 0.10.0
libtpu: 0.0.40
codegen_flags: <defaults>
</compile_context>

<pallas_src>
import functools
import math

import jax
import jax.numpy as jnp
from jax.experimental import pallas as pl
from jax.experimental.pallas import tpu as pltpu


def _round_up(n, m):
    return ((n + m - 1) // m) * m


def _vmem_cap_bytes():
    """Physical VMEM capacity (per TensorCore), with a conservative fallback."""
    try:
        info = pltpu.get_tpu_info()
        cap = getattr(info, "vmem_capacity_bytes", None)
        if cap:
            return int(cap)
    except Exception:
        pass
    return 64 * 2 ** 20  # safe for v7x (smallest VMEM of the target gens)


def _ffn_kernel(x_ref, w1_ref, b1_ref, w2_ref, b2_ref, o_ref, acc_ref, *,
                out_dim, compute_dtype):
    # x_ref:  (tm, Dp)   input rows (full contraction dim resident, constant over k)
    # w1_ref: (Dp, tk)   k-th column chunk of W1
    # b1_ref: (1, tk)    k-th chunk of b1 (f32)
    # w2_ref: (tk, Op)   k-th row chunk of W2
    # b2_ref: (1, Op)    full b2 (f32)
    # o_ref:  (tm, out_dim)
    # acc_ref:(tm, Op)   f32 accumulator, persists across the k axis
    k = pl.program_id(1)

    @pl.when(k == 0)
    def _():
        acc_ref[...] = jnp.zeros_like(acc_ref)

    x = x_ref[...].astype(compute_dtype)                 # cast in-kernel (no wrapper pass)
    h = jnp.dot(x, w1_ref[...], preferred_element_type=jnp.float32)
    h = jnp.maximum(h + b1_ref[...], 0.0)                # bias + ReLU in f32 (v5e-friendly)
    acc_ref[...] += jnp.dot(h.astype(compute_dtype), w2_ref[...],
                            preferred_element_type=jnp.float32)

    @pl.when(k == pl.num_programs(1) - 1)
    def _():
        out = acc_ref[...] + b2_ref[...]
        o_ref[...] = out[:, :out_dim].astype(o_ref.dtype)


def prepare_params(w1, b1, w2, b2, *, compute_dtype=jnp.bfloat16):
    """One-time (init-time) padding + cast of the FFN parameters.

    w1: (D, D), b1: (D,), w2: (D, out_dim), b2: (out_dim,)  -> TPU-friendly padded copies.
    """
    D = w1.shape[0]
    out_dim = w2.shape[1]
    Dp = _round_up(max(D, 128), 128)       # input/hidden dim -> multiple of 128 (MXU lanes)
    Op = _round_up(max(out_dim, 128), 128)  # second-matmul N dim (padded for the MXU only)
    cd = compute_dtype

    w1_p = jnp.zeros((Dp, Dp), cd).at[:D, :D].set(w1.astype(cd))
    w2_p = jnp.zeros((Dp, Op), cd).at[:D, :out_dim].set(w2.astype(cd))
    # Biases stay f32: they are added to the f32 accumulator.
    b1_p = jnp.zeros((1, Dp), jnp.float32).at[0, :D].set(b1.astype(jnp.float32))
    b2_p = jnp.zeros((1, Op), jnp.float32).at[0, :out_dim].set(b2.astype(jnp.float32))

    return {"w1": w1_p, "b1": b1_p, "w2": w2_p, "b2": b2_p,
            "d_model": D, "out_dim": out_dim, "compute_dtype": cd}


def feed_forward(x, params, *, tm=256):
    """Fused Linear(D, D) -> ReLU -> Linear(D, out_dim).

    x: (N, D) float32.  params: output of prepare_params().  Returns (N, out_dim) float32.
    """
    N, D = x.shape
    assert D == params["d_model"]
    w1_p, b1_p, w2_p, b2_p = params["w1"], params["b1"], params["w2"], params["b2"]
    cd = params["compute_dtype"]
    out_dim = params["out_dim"]
    Dp = w1_p.shape[0]
    Op = w2_p.shape[1]

    # ---- Row tiling (big tiles; clamped for tiny inputs) ----
    tm = max(8, min(tm, _round_up(N, 8)))
    Np = _round_up(N, tm)

    # Pad x only if actually required (row remainder or D not a multiple of 128).
    if (Np, Dp) != (N, D):
        x_p = jnp.zeros((Np, Dp), x.dtype).at[:N, :D].set(x)
    else:
        x_p = x

    # ---- Hidden-dim tiling: largest of {512, 256, 128} dividing Dp (MXU-width friendly) ----
    tk = next(c for c in (512, 256, 128) if Dp % c == 0)
    n_k = Dp // tk

    # ---- Capacity-aware VMEM budget (includes the implicit (tm, tk) `h` intermediate) ----
    w_item = jnp.dtype(cd).itemsize
    x_item = jnp.dtype(x_p.dtype).itemsize
    buf_bytes = (
        2 * tm * Dp * x_item          # x stream (double-buffered)
        + 2 * Dp * tk * w_item        # W1 chunk stream
        + 2 * tk * 4                  # b1 chunk stream (f32)
        + 2 * tk * Op * w_item        # W2 chunk stream
        + 2 * Op * 4                  # b2
        + 2 * tm * out_dim * 4        # output stream
        + tm * Op * 4                 # f32 accumulator scratch
        + tm * tk * (4 + w_item)      # `h` intermediate (f32 + compute-dtype copy)
    )
    cap = int(0.85 * _vmem_cap_bytes())
    vmem_limit = int(min(cap, max(32 * 2 ** 20, buf_bytes + 8 * 2 ** 20)))

    n_row_tiles = Np // tm
    cost = pl.CostEstimate(
        flops=2 * Np * Dp * Dp + 2 * Np * Dp * Op,
        transcendentals=0,
        bytes_accessed=int(Np * Dp * x_item
                           + n_row_tiles * (Dp * Dp + Dp * Op) * w_item
                           + Np * out_dim * 4),
    )

    kernel = functools.partial(_ffn_kernel, out_dim=out_dim, compute_dtype=cd)

    out = pl.pallas_call(
        kernel,
        out_shape=jax.ShapeDtypeStruct((Np, out_dim), jnp.float32),
        grid_spec=pltpu.PrefetchScalarGridSpec(
            num_scalar_prefetch=0,
            grid=(n_row_tiles, n_k),
            in_specs=[
                # x row tile: constant across k -> no re-DMA within a row tile.
                pl.BlockSpec((tm, Dp), lambda i, k: (i, 0)),
                # W1 column chunk, b1 chunk, W2 row chunk: streamed over k.
                pl.BlockSpec((Dp, tk), lambda i, k: (0, k)),
                pl.BlockSpec((1, tk), lambda i, k: (0, k)),
                pl.BlockSpec((tk, Op), lambda i, k: (k, 0)),
                pl.BlockSpec((1, Op), lambda i, k: (0, 0)),
            ],
            # Output is NOT lane-padded: (tm, 2) block of an (Np, 2) array -> tiny HBM writeback.
            out_specs=pl.BlockSpec((tm, out_dim), lambda i, k: (i, 0)),
            scratch_shapes=[pltpu.VMEM((tm, Op), jnp.float32)],
        ),
        compiler_params=pltpu.CompilerParams(
            dimension_semantics=("parallel", "arbitrary"),
            vmem_limit_bytes=vmem_limit,
        ),
        cost_estimate=cost,
    )(x_p, w1_p, b1_p, w2_p, b2_p)

    return out if Np == N else out[:N]


if __name__ == "__main__":
    d_model = 32
    batch, seq = 2, 8                       # N = 16 rows total
    key = jax.random.PRNGKey(0)
    kx, k1, k2, k3, k4 = jax.random.split(key, 5)

    # Deterministic parameter init (PyTorch-style uniform bounds).
    bound = 1.0 / math.sqrt(d_model)
    w1 = jax.random.uniform(k1, (d_model, d_model), jnp.float32, -bound, bound)
    b1 = jax.random.uniform(k2, (d_model,), jnp.float32, -bound, bound)
    w2 = jax.random.uniform(k3, (d_model, 2), jnp.float32, -bound, bound)
    b2 = jax.random.uniform(k4, (2,), jnp.float32, -bound, bound)

    x = jax.random.normal(kx, (batch, seq, d_model), jnp.float32)
    x2d = x.reshape(batch * seq, d_model)

    # Reference in plain JAX.
    ref = jnp.maximum(x @ w1 + b1, 0.0) @ w2 + b2

    # 1) f32 MXU path: exact (padding is zero-exact), tight tolerance.
    params_f32 = prepare_params(w1, b1, w2, b2, compute_dtype=jnp.float32)
    out_f32 = feed_forward(x2d, params_f32).reshape(batch, seq, 2)
    out_f32 = jax.block_until_ready(out_f32)
    assert out_f32.shape == (batch, seq, 2)
    assert jnp.allclose(out_f32, ref, atol=1e-5, rtol=1e-5)

    # 2) Default bf16 MXU path (f32 accumulation / epilogue): looser tolerance as expected.
    params_bf16 = prepare_params(w1, b1, w2, b2)  # compute_dtype=bf16 (v6e/v7x-native MXU)
    out_bf16 = feed_forward(x2d, params_bf16).reshape(batch, seq, 2)
    out_bf16 = jax.block_until_ready(out_bf16)
    assert jnp.allclose(out_bf16, ref, atol=5e-2, rtol=5e-2)

    print("KERNEL_OK")
</pallas_src>

<mosaic_0001>
module attributes {stable_mosaic.version = 11 : i64} {
  func.func @_ffn_kernel(%arg0: i32, %arg1: i32, %arg2: memref<16x128xf32, #tpu.memory_space<vmem>>, %arg3: memref<128x128xf32, #tpu.memory_space<vmem>>, %arg4: memref<1x128xf32, #tpu.memory_space<vmem>>, %arg5: memref<128x128xf32, #tpu.memory_space<vmem>>, %arg6: memref<1x128xf32, #tpu.memory_space<vmem>>, %arg7: memref<16x2xf32, #tpu.memory_space<vmem>>, %arg8: memref<16x128xf32, #tpu.memory_space<vmem>>) attributes {dimension_semantics = [#tpu.dimension_semantics<parallel>, #tpu.dimension_semantics<arbitrary>], iteration_bounds = array<i64: 1, 1>, scalar_prefetch = 0 : i64, scratch_operands = 1 : i64, tpu.core_type = #tpu.core_type<tc>, window_params = [{transform_indices = @transform_0, window_bounds = array<i64: 16, 128>}, {transform_indices = @transform_1, window_bounds = array<i64: 128, 128>}, {transform_indices = @transform_2, window_bounds = array<i64: 1, 128>}, {transform_indices = @transform_3, window_bounds = array<i64: 128, 128>}, {pipeline_mode = #tpu.pipeline_mode<synchronous>, transform_indices = @transform_4, window_bounds = array<i64: 1, 128>}, {transform_indices = @transform_5, window_bounds = array<i64: 16, 2>}]} {
    %c0_i32 = arith.constant 0 : i32
    %0 = arith.cmpi eq, %arg1, %c0_i32 : i32
    %1 = arith.extui %0 : i1 to i32
    %c0_i32_0 = arith.constant 0 : i32
    %2 = arith.cmpi ne, %1, %c0_i32_0 : i32
    scf.if %2 {
      %cst_16 = arith.constant 0.000000e+00 : f32
      %19 = vector.broadcast %cst_16 : f32 to vector<16x128xf32>
      %c0_17 = arith.constant 0 : index
      %c0_18 = arith.constant 0 : index
      %20 = vector.load %arg8[%c0_17, %c0_18] : memref<16x128xf32, #tpu.memory_space<vmem>>, vector<16x128xf32>
      tpu.vector_store %arg8[%c0_17, %c0_18], %19 {strides = array<i32>} : memref<16x128xf32, #tpu.memory_space<vmem>>, vector<16x128xf32>,
    } else {
    }
    %c0 = arith.constant 0 : index
    %c0_1 = arith.constant 0 : index
    %3 = vector.load %arg2[%c0, %c0_1] : memref<16x128xf32, #tpu.memory_space<vmem>>, vector<16x128xf32>
    %c0_2 = arith.constant 0 : index
    %c0_3 = arith.constant 0 : index
    %4 = vector.load %arg3[%c0_2, %c0_3] : memref<128x128xf32, #tpu.memory_space<vmem>>, vector<128x128xf32>
    %cst = arith.constant dense<0.000000e+00> : vector<16x128xf32>
    %5 = tpu.matmul %3, %4, %cst {dimension_numbers = #tpu.dot_dimension_numbers<[1], [0], [0], [1], [0, 0, 1, 1], [], []>} : vector<16x128xf32>, vector<128x128xf32>, vector<16x128xf32> -> vector<16x128xf32>
    %c0_4 = arith.constant 0 : index
    %c0_5 = arith.constant 0 : index
    %6 = vector.load %arg4[%c0_4, %c0_5] : memref<1x128xf32, #tpu.memory_space<vmem>>, vector<1x128xf32>
    %7 = vector.broadcast %6 : vector<1x128xf32> to vector<16x128xf32>
    %8 = arith.addf %5, %7 : vector<16x128xf32>
    %cst_6 = arith.constant 0.000000e+00 : f32
    %9 = vector.broadcast %cst_6 : f32 to vector<16x128xf32>
    %10 = arith.maximumf %8, %9 : vector<16x128xf32>
    %c0_7 = arith.constant 0 : index
    %c0_8 = arith.constant 0 : index
    %11 = vector.load %arg8[%c0_7, %c0_8] : memref<16x128xf32, #tpu.memory_space<vmem>>, vector<16x128xf32>
    %c0_9 = arith.constant 0 : index
    %c0_10 = arith.constant 0 : index
    %12 = vector.load %arg5[%c0_9, %c0_10] : memref<128x128xf32, #tpu.memory_space<vmem>>, vector<128x128xf32>
    %cst_11 = arith.constant dense<0.000000e+00> : vector<16x128xf32>
    %13 = tpu.matmul %10, %12, %cst_11 {dimension_numbers = #tpu.dot_dimension_numbers<[1], [0], [0], [1], [0, 0, 1, 1], [], []>} : vector<16x128xf32>, vector<128x128xf32>, vector<16x128xf32> -> vector<16x128xf32>
    %14 = arith.addf %11, %13 : vector<16x128xf32>
    %c0_12 = arith.constant 0 : index
    %c0_13 = arith.constant 0 : index
    %15 = vector.load %arg8[%c0_12, %c0_13] : memref<16x128xf32, #tpu.memory_space<vmem>>, vector<16x128xf32>
    tpu.vector_store %arg8[%c0_12, %c0_13], %14 {strides = array<i32>} : memref<16x128xf32, #tpu.memory_space<vmem>>, vector<16x128xf32>,
    %c0_i32_14 = arith.constant 0 : i32
    %16 = arith.cmpi eq, %arg1, %c0_i32_14 : i32
    %17 = arith.extui %16 : i1 to i32
    %c0_i32_15 = arith.constant 0 : i32
    %18 = arith.cmpi ne, %17, %c0_i32_15 : i32
    scf.if %18 {
      %c0_16 = arith.constant 0 : index
      %c0_17 = arith.constant 0 : index
      %19 = vector.load %arg8[%c0_16, %c0_17] : memref<16x128xf32, #tpu.memory_space<vmem>>, vector<16x128xf32>
      %c0_18 = arith.constant 0 : index
      %c0_19 = arith.constant 0 : index
      %20 = vector.load %arg6[%c0_18, %c0_19] : memref<1x128xf32, #tpu.memory_space<vmem>>, vector<1x128xf32>
      %21 = vector.broadcast %20 : vector<1x128xf32> to vector<16x128xf32>
      %22 = arith.addf %19, %21 : vector<16x128xf32>
      %23 = vector.extract_strided_slice %22 {offsets = [0, 0], sizes = [16, 2], strides = [1, 1]} : vector<16x128xf32> to vector<16x2xf32>
      %c0_20 = arith.constant 0 : index
      %c0_21 = arith.constant 0 : index
      %24 = vector.load %arg7[%c0_20, %c0_21] : memref<16x2xf32, #tpu.memory_space<vmem>>, vector<16x2xf32>
      tpu.vector_store %arg7[%c0_20, %c0_21], %23 {strides = array<i32>} : memref<16x2xf32, #tpu.memory_space<vmem>>, vector<16x2xf32>,
    } else {
    }
    return
  }
  func.func @transform_0(%arg0: i32, %arg1: i32) -> (i32, i32) {
    %c0_i32 = arith.constant 0 : i32
    %c0_i32_0 = arith.constant 0 : i32
    return %arg0, %c0_i32 : i32, i32
  }
  func.func @transform_1(%arg0: i32, %arg1: i32) -> (i32, i32) {
    %c0_i32 = arith.constant 0 : i32
    %c0_i32_0 = arith.constant 0 : i32
    return %c0_i32, %arg1 : i32, i32
  }
  func.func @transform_2(%arg0: i32, %arg1: i32) -> (i32, i32) {
    %c0_i32 = arith.constant 0 : i32
    %c0_i32_0 = arith.constant 0 : i32
    return %c0_i32, %arg1 : i32, i32
  }
  func.func @transform_3(%arg0: i32, %arg1: i32) -> (i32, i32) {
    %c0_i32 = arith.constant 0 : i32
    %c0_i32_0 = arith.constant 0 : i32
    return %arg1, %c0_i32 : i32, i32
  }
  func.func @transform_4(%arg0: i32, %arg1: i32) -> (i32, i32) {
    %c0_i32 = arith.constant 0 : i32
    %c0_i32_0 = arith.constant 0 : i32
    %c0_i32_1 = arith.constant 0 : i32
    return %c0_i32, %c0_i32_0 : i32, i32
  }
  func.func @transform_5(%arg0: i32, %arg1: i32) -> (i32, i32) {
    %c0_i32 = arith.constant 0 : i32
    %c0_i32_0 = arith.constant 0 : i32
    return %arg0, %c0_i32 : i32, i32
  }
}

</mosaic_0001>

<llo_original>
// kernel: tpu_custom_call.1
$region0: #{tpu_custom_call.1}
  #allocation0 [shape = 'u32[]', space=smem, size = 0x4, offset = 0x4, fixed_abs, tag = 'smem constant byte address 0x4 - core index']
  #allocation1 [shape = 'u32[144,128]{1,0:T(1,128)}', space=vmem, size = 0x12000, scoped, tag = 'internal scratch']
  #allocation2 [shape = 'f32[16,128]{1,0:T(8,128)}', space=vmem, size = 0x2000, scoped, tag = 'scratch operand']
  %s0 = inlined_call_operand.hbm [shape: f32[16,128], index: 0, kind: input, shape index: {}]
  %s1 = inlined_call_operand.hbm [shape: f32[128,128], index: 1, kind: input, shape index: {}]
  %s2 = inlined_call_operand.vmem [shape: f32[1,128], index: 2, kind: input, shape index: {}]
  %s3 = inlined_call_operand.hbm [shape: f32[128,128], index: 3, kind: input, shape index: {}]
  %s4 = inlined_call_operand.vmem [shape: f32[1,128], index: 4, kind: input, shape index: {}]
  %s5 = inlined_call_operand.vmem [shape: f32[16,2], index: 5, kind: output, shape index: {}]
  %s6 = sld [smem:[#allocation0]]
  $region50: #{tpu_custom_call.1} parent=0
    _
  %s8 = ssub.s32 1, %s6
  %s9 = scalar_select 0, %s8, %s6
  $region1: #{tpu_custom_call.1} parent=0
    #allocation3 [shape = 'u8[8192]{0}', space=vmem, size = 0x2000, scoped, tag = 'input window, operand 0, single buffered']
    #allocation4 [shape = 's32[1]{0}', space=sflag, size = 0x4, scoped, tag = 'scoped memory for tpu_custom_call.1']
    #allocation5 [shape = 'u8[65536]{0}', space=vmem, size = 0x10000, scoped, tag = 'input window, operand 1, single buffered']
    #allocation6 [shape = 's32[1]{0}', space=sflag, size = 0x4, scoped, tag = 'scoped memory for tpu_custom_call.1']
    #allocation7 [shape = 'u8[65536]{0}', space=vmem, size = 0x10000, scoped, tag = 'input window, operand 3, single buffered']
    %10 = vsyncpa [#allocation4], 0
    %11 = vsyncpa [#allocation6], 0
    // Predicated region
    $region2: #{tpu_custom_call.1} parent=1 // pred_check
      _
    $region3: #{tpu_custom_call.1} parent=1 // pred_check_branch
      %13 = sbr.rel (0) target = $region5
    $region4: #{tpu_custom_call.1} parent=1 // pred_region
      %s15 = ssub.s32 256, 256
      %16 = vsyncadd [#allocation4], %s15
      %s17 = sshll.u32 [#allocation3], 4
      %s18 = int_to_ptr.vmem [resolvable:$true] %s17
      %23 = dma.hbm_to_vmem [thread:$0]  %s0, 256, %s18, [#allocation4], 128, 128, 8
    $region5: #{tpu_custom_call.1} parent=1 // pred_fallthru
      _
    // Predicated region
    $region6: #{tpu_custom_call.1} parent=1 // pred_check
      _
    $region7: #{tpu_custom_call.1} parent=1 // pred_check_branch
      %25 = sbr.rel (0) target = $region9
    $region8: #{tpu_custom_call.1} parent=1 // pred_region
      %s27 = ssub.s32 2048, 2048
      %28 = vsyncadd [#allocation6], %s27
      %s29 = sshll.u32 [#allocation5], 4
      %s30 = int_to_ptr.vmem [resolvable:$true] %s29
      %35 = dma.hbm_to_vmem [thread:$0]  %s1, 2048, %s30, [#allocation6], 128, 128, 8
    $region9: #{tpu_custom_call.1} parent=1 // pred_fallthru
      _
    // Predicated region
    $region10: #{tpu_custom_call.1} parent=1 // pred_check
      _
    $region11: #{tpu_custom_call.1} parent=1 // pred_check_branch
      %37 = sbr.rel (0) target = $region13
    $region12: #{tpu_custom_call.1} parent=1 // pred_region
      _
    $region13: #{tpu_custom_call.1} parent=1 // pred_fallthru
      _
    // Predicated region
    $region14: #{tpu_custom_call.1} parent=1 // pred_check
      _
    $region15: #{tpu_custom_call.1} parent=1 // pred_check_branch
      %39 = sbr.rel (0) target = $region17
    $region16: #{tpu_custom_call.1} parent=1 // pred_region
      %s41 = ssub.s32 2048, 2048
      %42 = vsyncadd [#allocation6], %s41
      %s43 = sshll.u32 [#allocation7], 4
      %s44 = int_to_ptr.vmem [resolvable:$true] %s43
      %49 = dma.hbm_to_vmem [thread:$0]  %s3, 2048, %s44, [#allocation6], 128, 128, 8
    $region17: #{tpu_custom_call.1} parent=1 // pred_fallthru
      _
    // Predicated region
    $region18: #{tpu_custom_call.1} parent=1 // pred_check
      _
    $region19: #{tpu_custom_call.1} parent=1 // pred_check_branch
      %51 = sbr.rel (0) target = $region21
    $region20: #{tpu_custom_call.1} parent=1 // pred_region
      _
    $region21: #{tpu_custom_call.1} parent=1 // pred_fallthru
      _
    // Predicated region
    $region22: #{tpu_custom_call.1} parent=1 // pred_check
      _
    $region23: #{tpu_custom_call.1} parent=1 // pred_check_branch
      %53 = sbr.rel (0) target = $region25
    $region24: #{tpu_custom_call.1} parent=1 // pred_region
      %54 = dma.done [#allocation4], 256
    $region25: #{tpu_custom_call.1} parent=1 // pred_fallthru
      _
    // Predicated region
    $region26: #{tpu_custom_call.1} parent=1 // pred_check
      _
    $region27: #{tpu_custom_call.1} parent=1 // pred_check_branch
      %56 = sbr.rel (0) target = $region29
    $region28: #{tpu_custom_call.1} parent=1 // pred_region
      %57 = dma.done [#allocation6], 2048
    $region29: #{tpu_custom_call.1} parent=1 // pred_fallthru
      _
    // Predicated region
    $region30: #{tpu_custom_call.1} parent=1 // pred_check
      _
    $region31: #{tpu_custom_call.1} parent=1 // pred_check_branch
      %59 = sbr.rel (0) target = $region33
    $region32: #{tpu_custom_call.1} parent=1 // pred_region
      %60 = dma.done [#allocation6], 2048
    $region33: #{tpu_custom_call.1} parent=1 // pred_fallthru
      _
    %p61 = scmp.eq.s32.totalorder 0, 0
    // Predicated region
    $region34: #{tpu_custom_call.1} parent=1 // pred_check
      %p62 = pneg %p61
    $region35: #{tpu_custom_call.1} parent=1 // pred_check_branch
      %64 = sbr.rel (%p62) target = $region37
    $region36: #{tpu_custom_call.1} parent=1 // pred_region
      %65 = vst [vmem:[#allocation2] sm:$0xff] 0.0
      %66 = vst [vmem:[#allocation2 + $0x8] sm:$0xff] 0.0
    $region37: #{tpu_custom_call.1} parent=1 // pred_fallthru
      _
    %v67 = vld [vmem:[#allocation3] sm:$0xff]
    %v68 = vld [vmem:[#allocation3 + $0x8] sm:$0xff]
    %v69 = vld [vmem:[#allocation5] sm:$0xff]
    %v70 = vld [vmem:[#allocation5 + $0x8] sm:$0xff]
    %v71 = vld [vmem:[#allocation5 + $0x10] sm:$0xff]
    %v72 = vld [vmem:[#allocation5 + $0x18] sm:$0xff]
    %v73 = vld [vmem:[#allocation5 + $0x20] sm:$0xff]
    %v74 = vld [vmem:[#allocation5 + $0x28] sm:$0xff]
    %v75 = vld [vmem:[#allocation5 + $0x30] sm:$0xff]
    %v76 = vld [vmem:[#allocation5 + $0x38] sm:$0xff]
    %v77 = vld [vmem:[#allocation5 + $0x40] sm:$0xff]
    %v78 = vld [vmem:[#allocation5 + $0x48] sm:$0xff]
    %v79 = vld [vmem:[#allocation5 + $0x50] sm:$0xff]
    %v80 = vld [vmem:[#allocation5 + $0x58] sm:$0xff]
    %v81 = vld [vmem:[#allocation5 + $0x60] sm:$0xff]
    %v82 = vld [vmem:[#allocation5 + $0x68] sm:$0xff]
    %v83 = vld [vmem:[#allocation5 + $0x70] sm:$0xff]
    %v84 = vld [vmem:[#allocation5 + $0x78] sm:$0xff]
    %v85 = vld [vmem:[%s2] sm:$0x1]
    %v87 = vlaneseq
    %v88 = vshrl.u32 %v87, 7
    %v89 = vsub.s32 0, %v88
    %v90 = vrot.slane %v85, %v89
    %92 = vmatprep.subr.mxu0 0.0
    %93 = vmatpush1.msra.mxu0 %v69
    %94 = vmatprep.subr.mxu0 0.0
    %95 = vmatpush1.msra.mxu0 %v70
    %96 = vmatprep.subr.mxu0 0.0
    %97 = vmatpush1.msra.mxu0 %v71
    %98 = vmatprep.subr.mxu0 0.0
    %99 = vmatpush1.msra.mxu0 %v72
    %100 = vmatprep.subr.mxu0 0.0
    %101 = vmatpush1.msra.mxu0 %v73
    %102 = vmatprep.subr.mxu0 0.0
    %103 = vmatpush1.msra.mxu0 %v74
    %104 = vmatprep.subr.mxu0 0.0
    %105 = vmatpush1.msra.mxu0 %v75
    %106 = vmatprep.subr.mxu0 0.0
    %107 = vmatpush1.msra.mxu0 %v76
    %108 = vmatprep.subr.mxu0 0.0
    %109 = vmatpush1.msra.mxu0 %v77
    %110 = vmatprep.subr.mxu0 0.0
    %111 = vmatpush1.msra.mxu0 %v78
    %112 = vmatprep.subr.mxu0 0.0
    %113 = vmatpush1.msra.mxu0 %v79
    %114 = vmatprep.subr.mxu0 0.0
    %115 = vmatpush1.msra.mxu0 %v80
    %116 = vmatprep.subr.mxu0 0.0
    %117 = vmatpush1.msra.mxu0 %v81
    %118 = vmatprep.subr.mxu0 0.0
    %119 = vmatpush1.msra.mxu0 %v82
    %120 = vmatprep.subr.mxu0 0.0
    %121 = vmatpush1.msra.mxu0 %v83
    %122 = vmatprep.subr.mxu0 0.0
    %123 = vmatpush1.msra.mxu0 %v84
    %124 = vmatprep.subr.mxu0 0.0
    %125 = vmatpush1.msra.mxu0 0.0
    %126 = vmatprep.subr.mxu0 0.0
    %127 = vmatpush1.msra.mxu0 0.0
    %128 = vmatprep.subr.mxu0 0.0
    %129 = vmatpush1.msra.mxu0 0.0
    %130 = vmatprep.subr.mxu0 0.0
    %131 = vmatpush1.msra.mxu0 0.0
    %132 = vmatprep.subr.mxu0 0.0
    %133 = vmatpush1.msra.mxu0 0.0
    %134 = vmatprep.subr.mxu0 0.0
    %135 = vmatpush1.msra.mxu0 0.0
    %136 = vmatprep.subr.mxu0 0.0
    %137 = vmatpush1.msra.mxu0 0.0
    %138 = vmatprep.subr.mxu0 0.0
    %139 = vmatpush1.msra.mxu0 0.0
    %140 = vmatprep.subr.mxu0 0.0
    %141 = vmatpush1.msra.mxu0 0.0
    %142 = vmatprep.subr.mxu0 0.0
    %143 = vmatpush1.msra.mxu0 0.0
    %144 = vmatprep.subr.mxu0 0.0
    %145 = vmatpush1.msra.mxu0 0.0
    %146 = vmatprep.subr.mxu0 0.0
    %147 = vmatpush1.msra.mxu0 0.0
    %148 = vmatprep.subr.mxu0 0.0
    %149 = vmatpush1.msra.mxu0 0.0
    %150 = vmatprep.subr.mxu0 0.0
    %151 = vmatpush1.msra.mxu0 0.0
    %152 = vmatprep.subr.mxu0 0.0
    %153 = vmatpush1.msra.mxu0 0.0
    %154 = vmatprep.subr.mxu0 0.0
    %155 = vmatpush1.msra.mxu0 0.0
    %156 = vmatprep.mubr.f32.mxu0 0.0
    %157 = vmatmul.mubr.f32.gmra.mrb[0].mxu0 %v67
    %v158 = vpop.f32.mrb[0].mxu0
    %v159 = vadd.f32 %v90, %v158
    %v160 = vpop.f32.mrb[0].mxu0
    %161 = vmatprep.mubr.f32.mxu0 0.0
    %162 = vmatmul.mubr.f32.gmra.mrb[0].mxu0 %v68
    %v163 = vpop.f32.mrb[0].mxu0
    %v164 = vadd.f32 %v90, %v163
    %v165 = vpop.f32.mrb[0].mxu0
    %166 = vdwg.mxu0
    %v167 = vmax.f32 %v159, 0.0
    %v168 = vmax.f32 %v164, 0.0
    %v169 = vld [vmem:[#allocation2] sm:$0xff]
    %v170 = vld [vmem:[#allocation2 + $0x8] sm:$0xff]
    %v171 = vld [vmem:[#allocation7] sm:$0xff]
    %v172 = vld [vmem:[#allocation7 + $0x8] sm:$0xff]
    %v173 = vld [vmem:[#allocation7 + $0x10] sm:$0xff]
    %v174 = vld [vmem:[#allocation7 + $0x18] sm:$0xff]
    %v175 = vld [vmem:[#allocation7 + $0x20] sm:$0xff]
    %v176 = vld [vmem:[#allocation7 + $0x28] sm:$0xff]
    %v177 = vld [vmem:[#allocation7 + $0x30] sm:$0xff]
    %v178 = vld [vmem:[#allocation7 + $0x38] sm:$0xff]
    %v179 = vld [vmem:[#allocation7 + $0x40] sm:$0xff]
    %v180 = vld [vmem:[#allocation7 + $0x48] sm:$0xff]
    %v181 = vld [vmem:[#allocation7 + $0x50] sm:$0xff]
    %v182 = vld [vmem:[#allocation7 + $0x58] sm:$0xff]
    %v183 = vld [vmem:[#allocation7 + $0x60] sm:$0xff]
    %v184 = vld [vmem:[#allocation7 + $0x68] sm:$0xff]
    %v185 = vld [vmem:[#allocation7 + $0x70] sm:$0xff]
    %v186 = vld [vmem:[#allocation7 + $0x78] sm:$0xff]
    %187 = vmatprep.subr.mxu0 0.0
    %188 = vmatpush1.msra.mxu0 %v171
    %189 = vmatprep.subr.mxu0 0.0
    %190 = vmatpush1.msra.mxu0 %v172
    %191 = vmatprep.subr.mxu0 0.0
    %192 = vmatpush1.msra.mxu0 %v173
    %193 = vmatprep.subr.mxu0 0.0
    %194 = vmatpush1.msra.mxu0 %v174
    %195 = vmatprep.subr.mxu0 0.0
    %196 = vmatpush1.msra.mxu0 %v175
    %197 = vmatprep.subr.mxu0 0.0
    %198 = vmatpush1.msra.mxu0 %v176
    %199 = vmatprep.subr.mxu0 0.0
    %200 = vmatpush1.msra.mxu0 %v177
    %201 = vmatprep.subr.mxu0 0.0
    %202 = vmatpush1.msra.mxu0 %v178
    %203 = vmatprep.subr.mxu0 0.0
    %204 = vmatpush1.msra.mxu0 %v179
    %205 = vmatprep.subr.mxu0 0.0
    %206 = vmatpush1.msra.mxu0 %v180
    %207 = vmatprep.subr.mxu0 0.0
    %208 = vmatpush1.msra.mxu0 %v181
    %209 = vmatprep.subr.mxu0 0.0
    %210 = vmatpush1.msra.mxu0 %v182
    %211 = vmatprep.subr.mxu0 0.0
    %212 = vmatpush1.msra.mxu0 %v183
    %213 = vmatprep.subr.mxu0 0.0
    %214 = vmatpush1.msra.mxu0 %v184
    %215 = vmatprep.subr.mxu0 0.0
    %216 = vmatpush1.msra.mxu0 %v185
    %217 = vmatprep.subr.mxu0 0.0
    %218 = vmatpush1.msra.mxu0 %v186
    %219 = vmatprep.subr.mxu0 0.0
    %220 = vmatpush1.msra.mxu0 0.0
    %221 = vmatprep.subr.mxu0 0.0
    %222 = vmatpush1.msra.mxu0 0.0
    %223 = vmatprep.subr.mxu0 0.0
    %224 = vmatpush1.msra.mxu0 0.0
    %225 = vmatprep.subr.mxu0 0.0
    %226 = vmatpush1.msra.mxu0 0.0
    %227 = vmatprep.subr.mxu0 0.0
    %228 = vmatpush1.msra.mxu0 0.0
    %229 = vmatprep.subr.mxu0 0.0
    %230 = vmatpush1.msra.mxu0 0.0
    %231 = vmatprep.subr.mxu0 0.0
    %232 = vmatpush1.msra.mxu0 0.0
    %233 = vmatprep.subr.mxu0 0.0
    %234 = vmatpush1.msra.mxu0 0.0
    %235 = vmatprep.subr.mxu0 0.0
    %236 = vmatpush1.msra.mxu0 0.0
    %237 = vmatprep.subr.mxu0 0.0
    %238 = vmatpush1.msra.mxu0 0.0
    %239 = vmatprep.subr.mxu0 0.0
    %240 = vmatpush1.msra.mxu0 0.0
    %241 = vmatprep.subr.mxu0 0.0
    %242 = vmatpush1.msra.mxu0 0.0
    %243 = vmatprep.subr.mxu0 0.0
    %244 = vmatpush1.msra.mxu0 0.0
    %245 = vmatprep.subr.mxu0 0.0
    %246 = vmatpush1.msra.mxu0 0.0
    %247 = vmatprep.subr.mxu0 0.0
    %248 = vmatpush1.msra.mxu0 0.0
    %249 = vmatprep.subr.mxu0 0.0
    %250 = vmatpush1.msra.mxu0 0.0
    %251 = vmatprep.mubr.f32.mxu0 0.0
    %252 = vmatmul.mubr.f32.gmra.mrb[0].mxu0 %v167
    %v253 = vpop.f32.mrb[0].mxu0
    %v254 = vadd.f32 0.0, %v253
    %v255 = vpop.f32.mrb[0].mxu0
    %256 = vmatprep.mubr.f32.mxu0 0.0
    %257 = vmatmul.mubr.f32.gmra.mrb[0].mxu0 %v168
    %v258 = vpop.f32.mrb[0].mxu0
    %v259 = vadd.f32 0.0, %v258
    %v260 = vpop.f32.mrb[0].mxu0
    %261 = vdwg.mxu0
    %v262 = vadd.f32 %v169, %v254
    %v263 = vadd.f32 %v170, %v259
    %264 = vst [vmem:[#allocation2] sm:$0xff] %v262
    %265 = vst [vmem:[#allocation2 + $0x8] sm:$0xff] %v263
    // Predicated region
    $region38: #{tpu_custom_call.1} parent=1 // pred_check
      %p266 = pneg %p61
    $region39: #{tpu_custom_call.1} parent=1 // pred_check_branch
      %268 = sbr.rel (%p266) target = $region41
    $region40: #{tpu_custom_call.1} parent=1 // pred_region
      %v269 = vld [vmem:[#allocation2] sm:$0xff]
      %v270 = vld [vmem:[#allocation2 + $0x8] sm:$0xff]
      %v271 = vld [vmem:[%s4] sm:$0x1]
      %v273 = vlaneseq
      %v274 = vshrl.u32 %v273, 7
      %v275 = vsub.s32 0, %v274
      %v276 = vrot.slane %v271, %v275
      %v278 = vadd.f32 %v269, %v276
      %v279 = vadd.f32 %v270, %v276
      %vm280 = vcmask 15360
      %281 = vst.msk [vmem:[%s5] sm:$0xff] %vm280, %v278
      %282 = vst.msk [vmem:[%s5 + $0x8] sm:$0xff] %vm280, %v279
    $region41: #{tpu_custom_call.1} parent=1 // pred_fallthru
      _
    // Predicated region
    $region42: #{tpu_custom_call.1} parent=1 // pred_check
      _
    $region43: #{tpu_custom_call.1} parent=1 // pred_check_branch
      %284 = sbr.rel (0) target = $region45
    $region44: #{tpu_custom_call.1} parent=1 // pred_region
      _
    $region45: #{tpu_custom_call.1} parent=1 // pred_fallthru
      _
    // Predicated region
    $region46: #{tpu_custom_call.1} parent=1 // pred_check
      _
    $region47: #{tpu_custom_call.1} parent=1 // pred_check_branch
      %286 = sbr.rel (0) target = $region49
    $region48: #{tpu_custom_call.1} parent=1 // pred_region
      _
    $region49: #{tpu_custom_call.1} parent=1 // pred_fallthru
      _
    %287 = vsyncpa [#allocation4], 1
    %288 = vsyncpa [#allocation6], 1

</llo_original>
